<compile_context>
chip_gen: v7x
topology: tpu7x:2x2x1
jax: 0.10.0
libtpu: 0.0.40
codegen_flags: <defaults>
</compile_context>

<pallas_src>
import jax
import jax.numpy as jnp
import numpy as np
from jax.experimental import pallas as pl
from jax.experimental.pallas import tpu as pltpu


# ---------------------------------------------------------------------------
# Pallas path 1: whole-array HBM -> HBM DMA copy (no VMEM staging).
# ---------------------------------------------------------------------------
def _dma_copy_kernel(x_ref, o_ref, sem):
    cp = pltpu.make_async_copy(x_ref, o_ref, sem)
    cp.start()
    cp.wait()


def _deflatten_dma(x, shape):
    B, N = x.shape
    itemsize = jnp.dtype(x.dtype).itemsize
    flat = pl.pallas_call(
        _dma_copy_kernel,
        out_shape=jax.ShapeDtypeStruct((B, N), x.dtype),
        in_specs=[pl.BlockSpec(memory_space=pl.ANY)],
        out_specs=pl.BlockSpec(memory_space=pl.ANY),
        scratch_shapes=[pltpu.SemaphoreType.DMA],
        cost_estimate=pl.CostEstimate(
            flops=0, transcendentals=0, bytes_accessed=2 * B * N * itemsize),
    )(x)
    return flat.reshape((B, *shape))


# ---------------------------------------------------------------------------
# Pallas path 2: tiled identity copy (lane-dense tiles, cdiv grid, no padding).
# ---------------------------------------------------------------------------
def _copy_kernel(x_ref, o_ref):
    o_ref[...] = x_ref[...]


_TILE_BYTES = 4 * 1024 * 1024   # per-tile cap (4 in/out double-buffers = 16 MiB)
_VMEM_LIMIT = 32 * 1024 * 1024  # explicit: v5e scoped default is only 16 MiB


def _pick_blocks(B, N, itemsize):
    # Lane (last) dim: full-N blocks when an 8-row stripe fits the cap —
    # fully contiguous HBM DMAs and unmasked lane-dense stores. Otherwise
    # fixed 2048-lane tiles (multiple of 128) with a cdiv grid.
    if 8 * N * itemsize <= _TILE_BYTES:
        block_n = N                       # full extent: always a legal block
    else:
        block_n = 2048                    # multiple of 128; edge block masked

    # Row (second-to-last) dim: multiple of 8, sized to the per-tile byte cap,
    # capped at 512 rows; small batches use the full extent (legal block).
    rows_cap = max(8, (_TILE_BYTES // max(1, block_n * itemsize)) // 8 * 8)
    rows_cap = min(rows_cap, 512)
    if B <= rows_cap:
        block_b = B                       # full extent: always legal
    else:
        block_b = rows_cap                # multiple of 8; edge block masked

    # v7x has 2 TensorCores: if everything collapsed to a single grid point
    # but there are enough rows, split rows so both cores issue DMAs.
    if block_b == B and block_n == N and B >= 16:
        block_b = max(8, (((B + 1) // 2) + 7) // 8 * 8)

    return block_b, block_n


def _deflatten_copy(x, shape):
    B, N = x.shape
    itemsize = jnp.dtype(x.dtype).itemsize
    block_b, block_n = _pick_blocks(B, N, itemsize)
    grid = (pl.cdiv(B, block_b), pl.cdiv(N, block_n))

    flat = pl.pallas_call(
        _copy_kernel,
        out_shape=jax.ShapeDtypeStruct((B, N), x.dtype),
        grid=grid,
        in_specs=[pl.BlockSpec((block_b, block_n), lambda i, j: (i, j))],
        out_specs=pl.BlockSpec((block_b, block_n), lambda i, j: (i, j)),
        compiler_params=pltpu.CompilerParams(
            dimension_semantics=("parallel", "parallel"),
            vmem_limit_bytes=_VMEM_LIMIT),
        cost_estimate=pl.CostEstimate(
            flops=0, transcendentals=0, bytes_accessed=2 * B * N * itemsize),
    )(x)
    return flat.reshape((B, *shape))


# ---------------------------------------------------------------------------
# Public wrapper (== DeFlatten.forward)
# ---------------------------------------------------------------------------
def deflatten(x, shape, *, copy=None):
    """x: (B, N) with N == prod(shape). Returns (B, *shape), same dtype.

    copy=None  -> metadata-only reshape (free; matches torch .view).
    copy="dma" -> explicit HBM->HBM DMA copy kernel, then reshape.
    copy="tile"-> explicit tiled VMEM copy kernel, then reshape.
    """
    B, N = x.shape
    assert N == int(np.prod(shape)), "flattened size must match target shape"
    if copy == "dma":
        return _deflatten_dma(x, shape)
    if copy == "tile":
        return _deflatten_copy(x, shape)
    # Primary path: reshape is already a zero-cost bitcast in XLA.
    return x.reshape((B, *shape))


if __name__ == "__main__":
    key = jax.random.PRNGKey(0)
    # Target shape like an NCHW feature map: (C, H, W) = (4, 16, 16)
    target_shape = (4, 16, 16)
    B = 2
    N = int(np.prod(target_shape))  # 1024

    x = jax.random.normal(key, (B, N), dtype=jnp.float32)
    ref = np.asarray(x).reshape(B, *target_shape)  # == torch .view semantics

    # Primary (free reshape) path.
    y = jax.block_until_ready(deflatten(x, target_shape))
    assert y.shape == (B, *target_shape) and y.dtype == x.dtype
    np.testing.assert_array_equal(np.asarray(y), ref)

    # Pallas HBM->HBM DMA copy path.
    y_dma = jax.block_until_ready(deflatten(x, target_shape, copy="dma"))
    assert y_dma.shape == (B, *target_shape) and y_dma.dtype == x.dtype
    np.testing.assert_array_equal(np.asarray(y_dma), ref)

    # Pallas tiled VMEM copy path.
    y_tile = jax.block_until_ready(deflatten(x, target_shape, copy="tile"))
    assert y_tile.shape == (B, *target_shape) and y_tile.dtype == x.dtype
    np.testing.assert_array_equal(np.asarray(y_tile), ref)

    print("KERNEL_OK")
</pallas_src>

<mosaic_0001>
module attributes {stable_mosaic.version = 11 : i64} {
  func.func @_dma_copy_kernel(%arg0: memref<2x1024xf32, #tpu.memory_space<any>>, %arg1: memref<2x1024xf32, #tpu.memory_space<any>>, %arg2: memref<!tpu.dma_semaphore, #tpu.memory_space<semaphore_mem>>) attributes {dimension_semantics = [], scalar_prefetch = 0 : i64, scratch_operands = 1 : i64, tpu.core_type = #tpu.core_type<tc>} {
    tpu.enqueue_dma source(%arg0 : memref<2x1024xf32, #tpu.memory_space<any>>) target(%arg1 : memref<2x1024xf32, #tpu.memory_space<any>>) target_semaphore(%arg2 : memref<!tpu.dma_semaphore, #tpu.memory_space<semaphore_mem>>)
    tpu.wait_dma2 semaphore(%arg2 : memref<!tpu.dma_semaphore, #tpu.memory_space<semaphore_mem>>) src(%arg0 : memref<2x1024xf32, #tpu.memory_space<any>>) dst(%arg1 : memref<2x1024xf32, #tpu.memory_space<any>>)
    return
  }
}

</mosaic_0001>

<llo_original>
// kernel: tpu_custom_call.1
$region0: #{tpu_custom_call.1}
  #allocation0 [shape = 'u32[]', space=smem, size = 0x4, offset = 0x4, fixed_abs, tag = 'smem constant byte address 0x4 - core index']
  #allocation1 [shape = 'u32[144,128]{1,0:T(1,128)}', space=vmem, size = 0x12000, scoped, tag = 'internal scratch']
  #allocation2 [shape = 's32[1]{0}', space=sflag, size = 0x4, scoped, tag = 'scratch operand']
  #allocation3 [shape = 's32[]', space=sflag, size = 0x4, offset = 0, fixed_abs, tag = 'sflag constant byte address 0x0 - dummy sync flag']
  #allocation4 [shape = 'u32[0]{0}', space=smem, size = 0, offset = 0, fixed_abs, tag = 'smem constant byte address 0x0 - null']
  %s0 = inlined_call_operand.hbm [shape: f32[2,1024], index: 0, kind: input, shape index: {}]
  %s1 = inlined_call_operand.hbm [shape: f32[2,1024], index: 1, kind: output, shape index: {}]
  %s2 = sld [smem:[#allocation0]]
  $region2: #{tpu_custom_call.1} parent=0
    _
  %s4 = ssub.s32 1, %s2
  %s5 = scalar_select 0, %s4, %s2
  %s7 = sshll.u32 1, 14
  %s8 = sxor.u32 4294967295, %s7
  %s11 = sshll.u32 3, 24
  %s12 = sxor.u32 4294967295, %s11
  %s13 = sand.u32 0, %s12
  %s15 = sor.u32 %s13, 0
  %18 = dma.general %s0, 256, %s1, [#allocation2], [#allocation3], [#allocation4], %s15, 0
  %s19 = smul.u32 2, 1
  %s20 = smul.u32 %s19, 8
  %s21 = sshll.u32 %s20, 4
  %22 = dma.done [#allocation2], %s21
  %23 = vsyncmov [#allocation2]
  %s24 = vpop.sfrf %23
  %p25 = scmp.eq.s32.totalorder %s24, 0
  %p26 = pneg %p25
  %28 = shalt.err (%p26)

</llo_original>
